<compile_context>
chip_gen: v7x
topology: tpu7x:2x2x1
jax: 0.10.0
libtpu: 0.0.40
codegen_flags: <defaults>
</compile_context>

<pallas_src>
from functools import partial

import jax
import jax.numpy as jnp
from jax import lax
from jax.experimental import pallas as pl
from jax.experimental.pallas import tpu as pltpu

LANE = 128


def _round_up(n: int, m: int) -> int:
    return ((n + m - 1) // m) * m


# ---------------------------------------------------------------------------
# Parameter construction (pure-JAX glue, mirrors Template.create_new_templates)
# ---------------------------------------------------------------------------
def build_template_params(S: int, var: int, stride: int = 1):
    assert stride == 1, "kernel implemented for stride=1 (default)"
    n_sq = S * S
    tau = 0.5 / n_sq
    alpha = n_sq / (1.0 + n_sq)
    beta = 4.0

    # gkern(2S-1, var, vmin=0, vmax=1)
    M = 2 * S - 1
    n = jnp.arange(M, dtype=jnp.float32) - (M - 1.0) / 2.0
    sig2 = 2.0 * float(var) * float(var)
    g1 = jnp.exp(-(n ** 2) / sig2)
    g2 = jnp.outer(g1, g1)                                 # (2S-1, 2S-1)

    base = jax.nn.relu(g2) * 2.0 - 1.0
    base = tau * jnp.maximum(beta * base / S, -1.0)        # clamp(min=-1)

    # unfold(0,S,1).unfold(1,S,1).reshape(-1,S,S) then flip along template axis
    rows = []
    for a in range(S):
        for b in range(S):
            rows.append(base[a:a + S, b:b + S])
    templates = jnp.stack(rows, axis=0)                    # (S*S, S, S)
    templates_f = templates[::-1]                          # torch.flip(dims=(0,))

    neg = -tau * jnp.ones((1, S, S), jnp.float32)
    templates_b = jnp.concatenate([templates_f, neg], axis=0)  # (S*S+1, S, S)

    p_T = jnp.concatenate(
        [jnp.full((n_sq,), alpha / n_sq, dtype=jnp.float32),
         jnp.array([1.0 - alpha], dtype=jnp.float32)]
    )                                                      # (S*S+1,)
    return templates_f, templates_b, p_T, tau


def pack_template_operands(templates_f, templates_b, p_T):
    """One-time prep: flatten / transpose / zero-pad to lane-dense 128 tiles.

    Zero pads are mathematically inert: padded spatial columns never win the
    argmax (masked with -inf in-kernel), contribute 0 to both matmuls, and
    padded template columns carry p_T = 0 weight in the loss.
    """
    Tn, S, _ = templates_b.shape
    P = S * S
    Ppad = _round_up(P, LANE)
    Tpad = _round_up(Tn, LANE)

    tf_pad = jnp.pad(templates_f.reshape(P, P).astype(jnp.float32),
                     ((0, Ppad - P), (0, Ppad - P)))        # (Ppad, Ppad)
    tbt_pad = jnp.pad(templates_b.reshape(Tn, P).T.astype(jnp.float32),
                      ((0, Ppad - P), (0, Tpad - Tn)))      # (Ppad, Tpad)
    pT_pad = jnp.pad(p_T.reshape(1, Tn).astype(jnp.float32),
                     ((0, 0), (0, Tpad - Tn)))              # (1, Tpad)
    return tf_pad, tbt_pad, pT_pad


# ---------------------------------------------------------------------------
# Pallas kernel: argmax -> template gather -> mask, plus the local loss
# ---------------------------------------------------------------------------
def template_kernel(x_ref, tf_ref, tbt_ref, pT_ref,
                    xm_ref, mask_ref, loss_ref,
                    *, B: int, C: int, P: int, tau: float, cutoff: float):
    BC, Ppad = x_ref.shape          # (B*C, padded spatial)
    Tpad = tbt_ref.shape[1]         # padded number of templates

    x = x_ref[...]                  # (BC, Ppad)   zero-padded beyond col P
    tf = tf_ref[...]                # (Ppad, Ppad) flattened templates_f (padded)
    tbt = tbt_ref[...]              # (Ppad, Tpad) flattened templates_b, transposed
    pT = pT_ref[...]                # (1, Tpad)    zero-padded

    # ---- get_masked_output: argmax over spatial == max_pool2d(out_size) ----
    col = lax.broadcasted_iota(jnp.int32, (BC, Ppad), 1)
    valid = col < P
    xin = jnp.where(valid, x, -jnp.inf)                    # pads never win the max
    xmax = jnp.max(xin, axis=-1, keepdims=True)            # (BC, 1)
    # exact torch.argmax first-max tie-break (kept: ties not provably impossible)
    idx = jnp.min(jnp.where(xin == xmax, col, Ppad),
                  axis=-1, keepdims=True)                  # (BC, 1)
    onehot = (col == idx).astype(jnp.float32)              # (BC, Ppad)

    # gather selected templates via one-hot matmul on the MXU (stride=1)
    sel = jnp.dot(onehot, tf, preferred_element_type=jnp.float32)   # (BC, Ppad)

    # global max over all selected templates, exactly as torch `.max()`
    sel_max = jnp.max(sel, keepdims=True)                  # (1, 1)
    inv_sel_max = 1.0 / sel_max                            # exact: (1,1) scalar
    mask_raw = sel * inv_sel_max

    if cutoff != 0.0:
        mask = jnp.maximum(mask_raw - cutoff, 0.0) * (1.0 / cutoff)
        x_masked = x * mask
    else:
        # Reference would divide by cutoff == 0 here (inf mask); keep the
        # finite normalized template instead, x_masked bypasses the mask.
        mask = mask_raw
        x_masked = x

    xm_ref[...] = x_masked
    mask_ref[...] = mask

    # ---- compute_local_loss: log-softmax over B via static (C, Tpad) slices ----
    tr = jnp.dot(x_masked * tau, tbt,
                 preferred_element_type=jnp.float32)       # (BC, Tpad)
    slices = [tr[b * C:(b + 1) * C, :] for b in range(B)]  # B x (C, Tpad)

    m = slices[0]
    for s in slices[1:]:
        m = jnp.maximum(m, s)                              # max over B (VPU)
    zs = []
    se = jnp.zeros_like(m)
    for s in slices:
        z = s - m
        zs.append(z)
        se = se + jnp.exp(z)                               # sum over B (VPU)
    log_se = jnp.log(se)

    acc = jnp.zeros((C, Tpad), jnp.float32)
    for z in zs:
        log_p = z - log_se                                 # log-softmax over B
        p = jnp.exp(log_p)                                 # softmax, no divide
        p_x = jnp.sum(p * pT, axis=-1, keepdims=True)      # (C, 1); pads weigh 0
        acc = acc + p * (log_p - jnp.log(p_x))             # p_x_T * log(p_x_T/p_x)
    loss_c = -jnp.sum(pT * acc, axis=-1, keepdims=True)    # (C, 1); pads weigh 0

    # lane-dense (1, LANE) store: loss for channel c in lane c, zeros elsewhere
    Lout = loss_ref.shape[1]
    lane = lax.broadcasted_iota(jnp.int32, (C, Lout), 1)
    sub = lax.broadcasted_iota(jnp.int32, (C, Lout), 0)
    loss_ref[...] = jnp.sum(jnp.where(lane == sub, loss_c, 0.0),
                            axis=0, keepdims=True)


# ---------------------------------------------------------------------------
# Wrapper (jitted; the x pad and output slices fuse around the pallas_call)
# ---------------------------------------------------------------------------
@partial(jax.jit, static_argnames=("tau", "cutoff"))
def template_forward(x_nchw, tf_pad, tbt_pad, pT_pad, *, tau, cutoff):
    B, C, H, W = x_nchw.shape
    assert H == W, "Template expects square spatial maps of size out_size"
    S = H
    P = S * S
    BC = B * C
    Ppad = tf_pad.shape[0]
    assert C <= LANE

    x2 = jnp.pad(x_nchw.reshape(BC, P).astype(jnp.float32),
                 ((0, 0), (0, Ppad - P)))                  # lane-dense rows

    vmem = pl.BlockSpec(memory_space=pltpu.MemorySpace.VMEM)
    xm, mask, loss_row = pl.pallas_call(
        partial(template_kernel, B=B, C=C, P=P,
                tau=float(tau), cutoff=float(cutoff)),
        out_shape=(
            jax.ShapeDtypeStruct((BC, Ppad), jnp.float32),
            jax.ShapeDtypeStruct((BC, Ppad), jnp.float32),
            jax.ShapeDtypeStruct((1, LANE), jnp.float32),
        ),
        in_specs=[vmem, vmem, vmem, vmem],
        out_specs=(vmem, vmem, vmem),
    )(x2, tf_pad, tbt_pad, pT_pad)

    x_masked = xm[:, :P].reshape(B, C, S, S)
    obs_mask = mask[:, :P].reshape(B, C, S, S)
    loss = loss_row[0, :C]
    return x_masked, obs_mask, loss


# ---------------------------------------------------------------------------
# Pure-JAX reference (mirrors the PyTorch forward), for a sanity check
# ---------------------------------------------------------------------------
def template_forward_ref(x_nchw, templates_f, templates_b, p_T, tau, cutoff):
    B, C, S, _ = x_nchw.shape
    P = S * S
    xf = x_nchw.reshape(B * C, P)
    idx = jnp.argmax(xf, axis=-1)
    sel = templates_f.reshape(-1, P)[idx].reshape(B, C, S, S)
    mask = sel / jnp.max(sel)
    mask = jnp.maximum(mask - cutoff, 0.0) / cutoff
    x_masked = x_nchw if cutoff == 0 else x_nchw * mask

    tb = templates_b.reshape(-1, P)
    tr = jnp.einsum('bcp,tp->cbt', x_masked.reshape(B, C, P) * tau, tb)
    p_x_T = jax.nn.softmax(tr, axis=1)
    p_x = jnp.einsum('t,cbt->cb', p_T, p_x_T)
    p_log = jnp.log(p_x_T / p_x[:, :, None])
    p_x_T_log = jnp.einsum('cbt,cbt->ct', p_x_T, p_log)
    loss = -jnp.einsum('t,ct->c', p_T, p_x_T_log)
    return x_masked, mask, loss


# ---------------------------------------------------------------------------
# Demo
# ---------------------------------------------------------------------------
if __name__ == "__main__":
    # Module config: Template(M=C, out_size=S, var=[4, 8], stride=1,
    # cutoff=0.2, initial_mixin_factor=0.0) -> current var = var[0] = 4.
    B, C, S = 2, 4, 8
    var = (4, 8)
    mixin = 0.0
    curr_var = int(var[0] + mixin * (var[1] - var[0]))
    cutoff = 0.2
    stride = 1

    templates_f, templates_b, p_T, tau = build_template_params(S, curr_var, stride)
    # One-time operand packing (hoisted out of the per-call hot path).
    tf_pad, tbt_pad, pT_pad = pack_template_operands(templates_f, templates_b, p_T)

    key = jax.random.PRNGKey(0)
    x = jax.random.normal(key, (B, C, S, S), dtype=jnp.float32)  # NCHW

    x_masked, obs_mask, loss = template_forward(
        x, tf_pad, tbt_pad, pT_pad, tau=tau, cutoff=cutoff)
    jax.block_until_ready((x_masked, obs_mask, loss))

    assert x_masked.shape == (B, C, S, S)
    assert obs_mask.shape == (B, C, S, S)
    assert loss.shape == (C,)
    assert bool(jnp.all(jnp.isfinite(x_masked)))
    assert bool(jnp.all(jnp.isfinite(obs_mask)))
    assert bool(jnp.all(jnp.isfinite(loss)))

    # Sanity check against the pure-JAX reference. Exact reciprocal for the
    # mask path allows tight tolerances now; the loss is a tiny KL-like value
    # dominated by cancellation, so keep a small absolute floor there.
    xm_r, mask_r, loss_r = template_forward_ref(x, templates_f, templates_b,
                                                p_T, tau, cutoff)
    assert bool(jnp.allclose(x_masked, xm_r, rtol=1e-5, atol=1e-6))
    assert bool(jnp.allclose(obs_mask, mask_r, rtol=1e-5, atol=1e-6))
    assert bool(jnp.allclose(loss, loss_r, rtol=1e-3, atol=1e-6))

    print("KERNEL_OK")
</pallas_src>

<mosaic_0001>
module attributes {stable_mosaic.version = 11 : i64} {
  func.func @template_kernel(%arg0: memref<8x128xf32, #tpu.memory_space<vmem>>, %arg1: memref<128x128xf32, #tpu.memory_space<vmem>>, %arg2: memref<128x128xf32, #tpu.memory_space<vmem>>, %arg3: memref<1x128xf32, #tpu.memory_space<vmem>>, %arg4: memref<8x128xf32, #tpu.memory_space<vmem>>, %arg5: memref<8x128xf32, #tpu.memory_space<vmem>>, %arg6: memref<1x128xf32, #tpu.memory_space<vmem>>) attributes {dimension_semantics = [], scalar_prefetch = 0 : i64, scratch_operands = 0 : i64, tpu.core_type = #tpu.core_type<tc>} {
    %c0 = arith.constant 0 : index
    %c0_0 = arith.constant 0 : index
    %0 = vector.load %arg0[%c0, %c0_0] : memref<8x128xf32, #tpu.memory_space<vmem>>, vector<8x128xf32>
    %c0_1 = arith.constant 0 : index
    %c0_2 = arith.constant 0 : index
    %1 = vector.load %arg1[%c0_1, %c0_2] : memref<128x128xf32, #tpu.memory_space<vmem>>, vector<128x128xf32>
    %c0_3 = arith.constant 0 : index
    %c0_4 = arith.constant 0 : index
    %2 = vector.load %arg2[%c0_3, %c0_4] : memref<128x128xf32, #tpu.memory_space<vmem>>, vector<128x128xf32>
    %c0_5 = arith.constant 0 : index
    %c0_6 = arith.constant 0 : index
    %3 = vector.load %arg3[%c0_5, %c0_6] : memref<1x128xf32, #tpu.memory_space<vmem>>, vector<1x128xf32>
    %4 = tpu.iota {dimensions = array<i32: 1>} : vector<8x128xi32>
    %c64_i32 = arith.constant 64 : i32
    %5 = vector.broadcast %c64_i32 : i32 to vector<8x128xi32>
    %6 = arith.cmpi slt, %4, %5 : vector<8x128xi32>
    %cst = arith.constant 0xFF800000 : f32
    %7 = vector.broadcast %cst : f32 to vector<8x128xf32>
    %8 = arith.select %6, %0, %7 : vector<8x128xi1>, vector<8x128xf32>
    %cst_7 = arith.constant dense<0xFF800000> : vector<8xf32>
    %9 = vector.multi_reduction <maximumf>, %8, %cst_7 [1] : vector<8x128xf32> to vector<8xf32>
    %10 = vector.shape_cast %9 : vector<8xf32> to vector<8x1xf32>
    %11 = vector.broadcast %10 : vector<8x1xf32> to vector<8x128xf32>
    %12 = arith.cmpf oeq, %8, %11 : vector<8x128xf32>
    %c128_i32 = arith.constant 128 : i32
    %13 = vector.broadcast %c128_i32 : i32 to vector<8x128xi32>
    %14 = arith.select %12, %4, %13 : vector<8x128xi1>, vector<8x128xi32>
    %cst_8 = arith.constant dense<2147483647> : vector<8xi32>
    %15 = vector.multi_reduction <minsi>, %14, %cst_8 [1] : vector<8x128xi32> to vector<8xi32>
    %16 = vector.shape_cast %15 : vector<8xi32> to vector<8x1xi32>
    %17 = vector.broadcast %16 : vector<8x1xi32> to vector<8x128xi32>
    %18 = arith.cmpi eq, %4, %17 : vector<8x128xi32>
    %19 = arith.extui %18 : vector<8x128xi1> to vector<8x128xi32>
    %20 = arith.sitofp %19 : vector<8x128xi32> to vector<8x128xf32>
    %cst_9 = arith.constant dense<0.000000e+00> : vector<8x128xf32>
    %21 = tpu.matmul %20, %1, %cst_9 {dimension_numbers = #tpu.dot_dimension_numbers<[1], [0], [0], [1], [0, 0, 1, 1], [], []>} : vector<8x128xf32>, vector<128x128xf32>, vector<8x128xf32> -> vector<8x128xf32>
    %22 = vector.shape_cast %21 : vector<8x128xf32> to vector<1x8x128xf32>
    %cst_10 = arith.constant dense<0xFF800000> : vector<1xf32>
    %23 = vector.multi_reduction <maximumf>, %22, %cst_10 [1, 2] : vector<1x8x128xf32> to vector<1xf32>
    %24 = vector.shape_cast %23 : vector<1xf32> to vector<1x1x1xf32>
    %25 = vector.extract %24[0, 0, 0] : f32 from vector<1x1x1xf32>
    %26 = vector.broadcast %25 : f32 to vector<1x1xf32>
    %cst_11 = arith.constant 1.000000e+00 : f32
    %27 = vector.broadcast %cst_11 : f32 to vector<1x1xf32>
    %28 = arith.divf %27, %26 : vector<1x1xf32>
    %29 = vector.broadcast %28 : vector<1x1xf32> to vector<8x128xf32>
    %30 = arith.mulf %21, %29 : vector<8x128xf32>
    %cst_12 = arith.constant 2.000000e-01 : f32
    %31 = vector.broadcast %cst_12 : f32 to vector<8x128xf32>
    %32 = arith.subf %30, %31 : vector<8x128xf32>
    %cst_13 = arith.constant 0.000000e+00 : f32
    %33 = vector.broadcast %cst_13 : f32 to vector<8x128xf32>
    %34 = arith.maximumf %32, %33 : vector<8x128xf32>
    %cst_14 = arith.constant 5.000000e+00 : f32
    %35 = vector.broadcast %cst_14 : f32 to vector<8x128xf32>
    %36 = arith.mulf %34, %35 : vector<8x128xf32>
    %37 = arith.mulf %0, %36 : vector<8x128xf32>
    %c0_15 = arith.constant 0 : index
    %c0_16 = arith.constant 0 : index
    %38 = vector.load %arg4[%c0_15, %c0_16] : memref<8x128xf32, #tpu.memory_space<vmem>>, vector<8x128xf32>
    tpu.vector_store %arg4[%c0_15, %c0_16], %37 {strides = array<i32>} : memref<8x128xf32, #tpu.memory_space<vmem>>, vector<8x128xf32>,
    %c0_17 = arith.constant 0 : index
    %c0_18 = arith.constant 0 : index
    %39 = vector.load %arg5[%c0_17, %c0_18] : memref<8x128xf32, #tpu.memory_space<vmem>>, vector<8x128xf32>
    tpu.vector_store %arg5[%c0_17, %c0_18], %36 {strides = array<i32>} : memref<8x128xf32, #tpu.memory_space<vmem>>, vector<8x128xf32>,
    %cst_19 = arith.constant 7.812500e-03 : f32
    %40 = vector.broadcast %cst_19 : f32 to vector<8x128xf32>
    %41 = arith.mulf %37, %40 : vector<8x128xf32>
    %cst_20 = arith.constant dense<0.000000e+00> : vector<8x128xf32>
    %42 = tpu.matmul %41, %2, %cst_20 {dimension_numbers = #tpu.dot_dimension_numbers<[1], [0], [0], [1], [0, 0, 1, 1], [], []>} : vector<8x128xf32>, vector<128x128xf32>, vector<8x128xf32> -> vector<8x128xf32>
    %43 = vector.extract_strided_slice %42 {offsets = [0, 0], sizes = [4, 128], strides = [1, 1]} : vector<8x128xf32> to vector<4x128xf32>
    %44 = vector.extract_strided_slice %42 {offsets = [4, 0], sizes = [4, 128], strides = [1, 1]} : vector<8x128xf32> to vector<4x128xf32>
    %45 = arith.maximumf %43, %44 : vector<4x128xf32>
    %cst_21 = arith.constant 0.000000e+00 : f32
    %46 = vector.broadcast %cst_21 : f32 to vector<4x128xf32>
    %47 = arith.subf %43, %45 : vector<4x128xf32>
    %48 = math.exp %47 : vector<4x128xf32>
    %49 = arith.addf %46, %48 : vector<4x128xf32>
    %50 = arith.subf %44, %45 : vector<4x128xf32>
    %51 = math.exp %50 : vector<4x128xf32>
    %52 = arith.addf %49, %51 : vector<4x128xf32>
    %53 = math.log %52 : vector<4x128xf32>
    %cst_22 = arith.constant 0.000000e+00 : f32
    %54 = vector.broadcast %cst_22 : f32 to vector<4x128xf32>
    %55 = arith.subf %47, %53 : vector<4x128xf32>
    %56 = math.exp %55 : vector<4x128xf32>
    %57 = vector.broadcast %3 : vector<1x128xf32> to vector<4x128xf32>
    %58 = arith.mulf %56, %57 : vector<4x128xf32>
    %cst_23 = arith.constant dense<0.000000e+00> : vector<4xf32>
    %59 = vector.multi_reduction <add>, %58, %cst_23 [1] : vector<4x128xf32> to vector<4xf32>
    %60 = vector.shape_cast %59 : vector<4xf32> to vector<4x1xf32>
    %61 = math.log %60 : vector<4x1xf32>
    %62 = vector.broadcast %61 : vector<4x1xf32> to vector<4x128xf32>
    %63 = arith.subf %55, %62 : vector<4x128xf32>
    %64 = arith.mulf %56, %63 : vector<4x128xf32>
    %65 = arith.addf %54, %64 : vector<4x128xf32>
    %66 = arith.subf %50, %53 : vector<4x128xf32>
    %67 = math.exp %66 : vector<4x128xf32>
    %68 = vector.broadcast %3 : vector<1x128xf32> to vector<4x128xf32>
    %69 = arith.mulf %67, %68 : vector<4x128xf32>
    %cst_24 = arith.constant dense<0.000000e+00> : vector<4xf32>
    %70 = vector.multi_reduction <add>, %69, %cst_24 [1] : vector<4x128xf32> to vector<4xf32>
    %71 = vector.shape_cast %70 : vector<4xf32> to vector<4x1xf32>
    %72 = math.log %71 : vector<4x1xf32>
    %73 = vector.broadcast %72 : vector<4x1xf32> to vector<4x128xf32>
    %74 = arith.subf %66, %73 : vector<4x128xf32>
    %75 = arith.mulf %67, %74 : vector<4x128xf32>
    %76 = arith.addf %65, %75 : vector<4x128xf32>
    %77 = vector.broadcast %3 : vector<1x128xf32> to vector<4x128xf32>
    %78 = arith.mulf %77, %76 : vector<4x128xf32>
    %cst_25 = arith.constant dense<0.000000e+00> : vector<4xf32>
    %79 = vector.multi_reduction <add>, %78, %cst_25 [1] : vector<4x128xf32> to vector<4xf32>
    %80 = vector.shape_cast %79 : vector<4xf32> to vector<4x1xf32>
    %cst_26 = arith.constant 0.000000e+00 : f32
    %81 = vector.broadcast %cst_26 : f32 to vector<4x1xf32>
    %82 = arith.subf %81, %80 : vector<4x1xf32>
    %83 = tpu.iota {dimensions = array<i32: 1>} : vector<4x128xi32>
    %84 = tpu.iota {dimensions = array<i32: 0>} : vector<4x128xi32>
    %85 = arith.cmpi eq, %83, %84 : vector<4x128xi32>
    %cst_27 = arith.constant 0.000000e+00 : f32
    %86 = vector.shape_cast %82 : vector<4x1xf32> to vector<4x1xf32>
    %87 = vector.broadcast %86 : vector<4x1xf32> to vector<4x128xf32>
    %88 = vector.broadcast %cst_27 : f32 to vector<4x128xf32>
    %89 = arith.select %85, %87, %88 : vector<4x128xi1>, vector<4x128xf32>
    %cst_28 = arith.constant dense<0.000000e+00> : vector<128xf32>
    %90 = vector.multi_reduction <add>, %89, %cst_28 [0] : vector<4x128xf32> to vector<128xf32>
    %91 = vector.shape_cast %90 : vector<128xf32> to vector<1x128xf32>
    %c0_29 = arith.constant 0 : index
    %c0_30 = arith.constant 0 : index
    %92 = vector.load %arg6[%c0_29, %c0_30] : memref<1x128xf32, #tpu.memory_space<vmem>>, vector<1x128xf32>
    tpu.vector_store %arg6[%c0_29, %c0_30], %91 {strides = array<i32>} : memref<1x128xf32, #tpu.memory_space<vmem>>, vector<1x128xf32>,
    return
  }
}

</mosaic_0001>

<llo_original>
// kernel: template_forward.1
$region0: #{template_forward.1}
  #allocation0 [shape = 'u32[]', space=smem, size = 0x4, offset = 0x4, fixed_abs, tag = 'smem constant byte address 0x4 - core index']
  #allocation1 [shape = 'u32[144,128]{1,0:T(1,128)}', space=vmem, size = 0x12000, scoped, tag = 'internal scratch']
  %s0 = inlined_call_operand.vmem [shape: f32[8,128], index: 0, kind: input, shape index: {}]
  %s1 = inlined_call_operand.hbm [shape: f32[128,128], index: 1, kind: input, shape index: {}]
  %s2 = inlined_call_operand.hbm [shape: f32[128,128], index: 2, kind: input, shape index: {}]
  %s3 = inlined_call_operand.vmem [shape: f32[1,128], index: 3, kind: input, shape index: {}]
  %s4 = inlined_call_operand.vmem [shape: f32[8,128], index: 4, kind: output, shape index: {0}]
  %s5 = inlined_call_operand.vmem [shape: f32[8,128], index: 5, kind: output, shape index: {1}]
  %s6 = inlined_call_operand.vmem [shape: f32[1,128], index: 6, kind: output, shape index: {2}]
  %7 = xla_tuple %s4, %s5, %s6
  %s8 = sld [smem:[#allocation0]]
  $region50: #{template_forward.1} parent=0
    _
  %s10 = ssub.s32 1, %s8
  %s11 = scalar_select 0, %s10, %s8
  $region1: #{template_forward.1} parent=0
    #allocation2 [shape = 'u8[65536]{0}', space=vmem, size = 0x10000, scoped, tag = 'input window, operand 1, single buffered']
    #allocation3 [shape = 's32[1]{0}', space=sflag, size = 0x4, scoped, tag = 'scoped memory for template_forward.1']
    #allocation4 [shape = 'u8[65536]{0}', space=vmem, size = 0x10000, scoped, tag = 'input window, operand 2, single buffered']
    #allocation5 [shape = 's32[1]{0}', space=sflag, size = 0x4, scoped, tag = 'scoped memory for template_forward.1']
    %12 = vsyncpa [#allocation3], 0
    %13 = vsyncpa [#allocation5], 0
    // Predicated region
    $region2: #{template_forward.1} parent=1 // pred_check
      _
    $region3: #{template_forward.1} parent=1 // pred_check_branch
      %15 = sbr.rel (0) target = $region5
    $region4: #{template_forward.1} parent=1 // pred_region
      _
    $region5: #{template_forward.1} parent=1 // pred_fallthru
      _
    // Predicated region
    $region6: #{template_forward.1} parent=1 // pred_check
      _
    $region7: #{template_forward.1} parent=1 // pred_check_branch
      %17 = sbr.rel (0) target = $region9
    $region8: #{template_forward.1} parent=1 // pred_region
      %s19 = ssub.s32 2048, 2048
      %20 = vsyncadd [#allocation3], %s19
      %s21 = sshll.u32 [#allocation2], 4
      %s22 = int_to_ptr.vmem [resolvable:$true] %s21
      %27 = dma.hbm_to_vmem [thread:$0]  %s1, 2048, %s22, [#allocation3], 128, 128, 8
    $region9: #{template_forward.1} parent=1 // pred_fallthru
      _
    // Predicated region
    $region10: #{template_forward.1} parent=1 // pred_check
      _
    $region11: #{template_forward.1} parent=1 // pred_check_branch
      %29 = sbr.rel (0) target = $region13
    $region12: #{template_forward.1} parent=1 // pred_region
      %s31 = ssub.s32 2048, 2048
      %32 = vsyncadd [#allocation5], %s31
      %s33 = sshll.u32 [#allocation4], 4
      %s34 = int_to_ptr.vmem [resolvable:$true] %s33
      %39 = dma.hbm_to_vmem [thread:$0]  %s2, 2048, %s34, [#allocation5], 128, 128, 8
    $region13: #{template_forward.1} parent=1 // pred_fallthru
      _
    // Predicated region
    $region14: #{template_forward.1} parent=1 // pred_check
      _
    $region15: #{template_forward.1} parent=1 // pred_check_branch
      %41 = sbr.rel (0) target = $region17
    $region16: #{template_forward.1} parent=1 // pred_region
      _
    $region17: #{template_forward.1} parent=1 // pred_fallthru
      _
    // Predicated region
    $region18: #{template_forward.1} parent=1 // pred_check
      _
    $region19: #{template_forward.1} parent=1 // pred_check_branch
      %43 = sbr.rel (0) target = $region21
    $region20: #{template_forward.1} parent=1 // pred_region
      %44 = dma.done [#allocation3], 2048
    $region21: #{template_forward.1} parent=1 // pred_fallthru
      _
    // Predicated region
    $region22: #{template_forward.1} parent=1 // pred_check
      _
    $region23: #{template_forward.1} parent=1 // pred_check_branch
      %46 = sbr.rel (0) target = $region25
    $region24: #{template_forward.1} parent=1 // pred_region
      %47 = dma.done [#allocation5], 2048
    $region25: #{template_forward.1} parent=1 // pred_fallthru
      _
    %v48 = vld [vmem:[%s0] sm:$0xff]
    %v49 = vld [vmem:[#allocation2] sm:$0xff]
    %v50 = vld [vmem:[#allocation2 + $0x8] sm:$0xff]
    %v51 = vld [vmem:[#allocation2 + $0x10] sm:$0xff]
    %v52 = vld [vmem:[#allocation2 + $0x18] sm:$0xff]
    %v53 = vld [vmem:[#allocation2 + $0x20] sm:$0xff]
    %v54 = vld [vmem:[#allocation2 + $0x28] sm:$0xff]
    %v55 = vld [vmem:[#allocation2 + $0x30] sm:$0xff]
    %v56 = vld [vmem:[#allocation2 + $0x38] sm:$0xff]
    %v57 = vld [vmem:[#allocation2 + $0x40] sm:$0xff]
    %v58 = vld [vmem:[#allocation2 + $0x48] sm:$0xff]
    %v59 = vld [vmem:[#allocation2 + $0x50] sm:$0xff]
    %v60 = vld [vmem:[#allocation2 + $0x58] sm:$0xff]
    %v61 = vld [vmem:[#allocation2 + $0x60] sm:$0xff]
    %v62 = vld [vmem:[#allocation2 + $0x68] sm:$0xff]
    %v63 = vld [vmem:[#allocation2 + $0x70] sm:$0xff]
    %v64 = vld [vmem:[#allocation2 + $0x78] sm:$0xff]
    %v65 = vld [vmem:[#allocation4] sm:$0xff]
    %v66 = vld [vmem:[#allocation4 + $0x8] sm:$0xff]
    %v67 = vld [vmem:[#allocation4 + $0x10] sm:$0xff]
    %v68 = vld [vmem:[#allocation4 + $0x18] sm:$0xff]
    %v69 = vld [vmem:[#allocation4 + $0x20] sm:$0xff]
    %v70 = vld [vmem:[#allocation4 + $0x28] sm:$0xff]
    %v71 = vld [vmem:[#allocation4 + $0x30] sm:$0xff]
    %v72 = vld [vmem:[#allocation4 + $0x38] sm:$0xff]
    %v73 = vld [vmem:[#allocation4 + $0x40] sm:$0xff]
    %v74 = vld [vmem:[#allocation4 + $0x48] sm:$0xff]
    %v75 = vld [vmem:[#allocation4 + $0x50] sm:$0xff]
    %v76 = vld [vmem:[#allocation4 + $0x58] sm:$0xff]
    %v77 = vld [vmem:[#allocation4 + $0x60] sm:$0xff]
    %v78 = vld [vmem:[#allocation4 + $0x68] sm:$0xff]
    %v79 = vld [vmem:[#allocation4 + $0x70] sm:$0xff]
    %v80 = vld [vmem:[#allocation4 + $0x78] sm:$0xff]
    %v81 = vld [vmem:[%s3] sm:$0x1]
    %v82 = vlaneseq
    %v83 = vand.u32 %v82, 127
    %vm84 = vcmp.lt.s32.totalorder %v83, 64
    %v85 = vsel %vm84, %v48, -inf
    %86 = vmax.xlane.f32.xlu0 %v85
    %v87 = vpop.xlane.xlu0 %86
    %vm88 = vcmp.eq.f32.partialorder %v85, %v87
    %v89 = vsel %vm88, %v83, 128
    %v90 = vand.u32 %v89, 65535
    %v91 = vshra.s32 %v89, 16
    %v92 = vcvt.s32.f32 %v90
    %v93 = vcvt.s32.f32 %v91
    %94 = vmin.xlane.f32.xlu0 %v93
    %v95 = vpop.xlane.xlu0 %94
    %vm96 = vcmp.eq.f32.partialorder %v93, %v95
    %v97 = vsel %vm96, %v92, inf
    %98 = vmin.xlane.f32.xlu0 %v97
    %v99 = vpop.xlane.xlu0 %98
    %v100 = vcvt.f32.s32 %v99
    %v101 = vcvt.f32.s32 %v95
    %v102 = vshll.u32 %v101, 16
    %v103 = vadd.s32 %v102, %v100
    %vm104 = vcmp.eq.s32.totalorder %v83, %v103
    %v105 = vsel %vm104, 1, 0
    %v106 = vcvt.s32.f32 %v105
    %107 = vmatprep.subr.mxu0 0.0
    %108 = vmatpush1.msra.mxu0 %v49
    %109 = vmatprep.subr.mxu0 0.0
    %110 = vmatpush1.msra.mxu0 %v50
    %111 = vmatprep.subr.mxu0 0.0
    %112 = vmatpush1.msra.mxu0 %v51
    %113 = vmatprep.subr.mxu0 0.0
    %114 = vmatpush1.msra.mxu0 %v52
    %115 = vmatprep.subr.mxu0 0.0
    %116 = vmatpush1.msra.mxu0 %v53
    %117 = vmatprep.subr.mxu0 0.0
    %118 = vmatpush1.msra.mxu0 %v54
    %119 = vmatprep.subr.mxu0 0.0
    %120 = vmatpush1.msra.mxu0 %v55
    %121 = vmatprep.subr.mxu0 0.0
    %122 = vmatpush1.msra.mxu0 %v56
    %123 = vmatprep.subr.mxu0 0.0
    %124 = vmatpush1.msra.mxu0 %v57
    %125 = vmatprep.subr.mxu0 0.0
    %126 = vmatpush1.msra.mxu0 %v58
    %127 = vmatprep.subr.mxu0 0.0
    %128 = vmatpush1.msra.mxu0 %v59
    %129 = vmatprep.subr.mxu0 0.0
    %130 = vmatpush1.msra.mxu0 %v60
    %131 = vmatprep.subr.mxu0 0.0
    %132 = vmatpush1.msra.mxu0 %v61
    %133 = vmatprep.subr.mxu0 0.0
    %134 = vmatpush1.msra.mxu0 %v62
    %135 = vmatprep.subr.mxu0 0.0
    %136 = vmatpush1.msra.mxu0 %v63
    %137 = vmatprep.subr.mxu0 0.0
    %138 = vmatpush1.msra.mxu0 %v64
    %139 = vmatprep.subr.mxu0 0.0
    %140 = vmatpush1.msra.mxu0 0.0
    %141 = vmatprep.subr.mxu0 0.0
    %142 = vmatpush1.msra.mxu0 0.0
    %143 = vmatprep.subr.mxu0 0.0
    %144 = vmatpush1.msra.mxu0 0.0
    %145 = vmatprep.subr.mxu0 0.0
    %146 = vmatpush1.msra.mxu0 0.0
    %147 = vmatprep.subr.mxu0 0.0
    %148 = vmatpush1.msra.mxu0 0.0
    %149 = vmatprep.subr.mxu0 0.0
    %150 = vmatpush1.msra.mxu0 0.0
    %151 = vmatprep.subr.mxu0 0.0
    %152 = vmatpush1.msra.mxu0 0.0
    %153 = vmatprep.subr.mxu0 0.0
    %154 = vmatpush1.msra.mxu0 0.0
    %155 = vmatprep.subr.mxu0 0.0
    %156 = vmatpush1.msra.mxu0 0.0
    %157 = vmatprep.subr.mxu0 0.0
    %158 = vmatpush1.msra.mxu0 0.0
    %159 = vmatprep.subr.mxu0 0.0
    %160 = vmatpush1.msra.mxu0 0.0
    %161 = vmatprep.subr.mxu0 0.0
    %162 = vmatpush1.msra.mxu0 0.0
    %163 = vmatprep.subr.mxu0 0.0
    %164 = vmatpush1.msra.mxu0 0.0
    %165 = vmatprep.subr.mxu0 0.0
    %166 = vmatpush1.msra.mxu0 0.0
    %167 = vmatprep.subr.mxu0 0.0
    %168 = vmatpush1.msra.mxu0 0.0
    %169 = vmatprep.subr.mxu0 0.0
    %170 = vmatpush1.msra.mxu0 0.0
    %171 = vmatprep.mubr.f32.mxu0 0.0
    %172 = vmatmul.mubr.f32.gmra.mrb[0].mxu0 %v106
    %v173 = vpop.f32.mrb[0].mxu0
    %v174 = vadd.f32 0.0, %v173
    %v175 = vpop.f32.mrb[0].mxu0
    %176 = vdwg.mxu0
    %177 = vmax.xlane.f32.xlu0 %v174
    %v178 = vpop.xlane.xlu0 %177
    %v179 = vrot.slane %v178, 4
    %v180 = vmax.f32 %v178, %v179
    %v181 = vrot.slane %v180, 2
    %v182 = vmax.f32 %v180, %v181
    %v183 = vrot.slane %v182, 1
    %v184 = vmax.f32 %v182, %v183
    %s185 = vtos %v184
    %v186 = vstv %s185
    %v187 = vrcp.pop %v186
    %v188 = vmul.f32 1.0, %v187
    %v189 = vmul.f32 %v174, %v188
    %v190 = vsub.f32 %v189, 0.2
    %v191 = vmax.f32 %v190, 0.0
    %v192 = vmul.f32 %v191, 5.0
    %v193 = vmul.f32 %v48, %v192
    %194 = vst [vmem:[%s4] sm:$0xff] %v193
    %195 = vst [vmem:[%s5] sm:$0xff] %v192
    %v196 = vmul.f32 %v193, 0.0078125
    %197 = vmatprep.subr.mxu0 0.0
    %198 = vmatpush1.msra.mxu0 %v65
    %199 = vmatprep.subr.mxu0 0.0
    %200 = vmatpush1.msra.mxu0 %v66
    %201 = vmatprep.subr.mxu0 0.0
    %202 = vmatpush1.msra.mxu0 %v67
    %203 = vmatprep.subr.mxu0 0.0
    %204 = vmatpush1.msra.mxu0 %v68
    %205 = vmatprep.subr.mxu0 0.0
    %206 = vmatpush1.msra.mxu0 %v69
    %207 = vmatprep.subr.mxu0 0.0
    %208 = vmatpush1.msra.mxu0 %v70
    %209 = vmatprep.subr.mxu0 0.0
    %210 = vmatpush1.msra.mxu0 %v71
    %211 = vmatprep.subr.mxu0 0.0
    %212 = vmatpush1.msra.mxu0 %v72
    %213 = vmatprep.subr.mxu0 0.0
    %214 = vmatpush1.msra.mxu0 %v73
    %215 = vmatprep.subr.mxu0 0.0
    %216 = vmatpush1.msra.mxu0 %v74
    %217 = vmatprep.subr.mxu0 0.0
    %218 = vmatpush1.msra.mxu0 %v75
    %219 = vmatprep.subr.mxu0 0.0
    %220 = vmatpush1.msra.mxu0 %v76
    %221 = vmatprep.subr.mxu0 0.0
    %222 = vmatpush1.msra.mxu0 %v77
    %223 = vmatprep.subr.mxu0 0.0
    %224 = vmatpush1.msra.mxu0 %v78
    %225 = vmatprep.subr.mxu0 0.0
    %226 = vmatpush1.msra.mxu0 %v79
    %227 = vmatprep.subr.mxu0 0.0
    %228 = vmatpush1.msra.mxu0 %v80
    %229 = vmatprep.subr.mxu0 0.0
    %230 = vmatpush1.msra.mxu0 0.0
    %231 = vmatprep.subr.mxu0 0.0
    %232 = vmatpush1.msra.mxu0 0.0
    %233 = vmatprep.subr.mxu0 0.0
    %234 = vmatpush1.msra.mxu0 0.0
    %235 = vmatprep.subr.mxu0 0.0
    %236 = vmatpush1.msra.mxu0 0.0
    %237 = vmatprep.subr.mxu0 0.0
    %238 = vmatpush1.msra.mxu0 0.0
    %239 = vmatprep.subr.mxu0 0.0
    %240 = vmatpush1.msra.mxu0 0.0
    %241 = vmatprep.subr.mxu0 0.0
    %242 = vmatpush1.msra.mxu0 0.0
    %243 = vmatprep.subr.mxu0 0.0
    %244 = vmatpush1.msra.mxu0 0.0
    %245 = vmatprep.subr.mxu0 0.0
    %246 = vmatpush1.msra.mxu0 0.0
    %247 = vmatprep.subr.mxu0 0.0
    %248 = vmatpush1.msra.mxu0 0.0
    %249 = vmatprep.subr.mxu0 0.0
    %250 = vmatpush1.msra.mxu0 0.0
    %251 = vmatprep.subr.mxu0 0.0
    %252 = vmatpush1.msra.mxu0 0.0
    %253 = vmatprep.subr.mxu0 0.0
    %254 = vmatpush1.msra.mxu0 0.0
    %255 = vmatprep.subr.mxu0 0.0
    %256 = vmatpush1.msra.mxu0 0.0
    %257 = vmatprep.subr.mxu0 0.0
    %258 = vmatpush1.msra.mxu0 0.0
    %259 = vmatprep.subr.mxu0 0.0
    %260 = vmatpush1.msra.mxu0 0.0
    %261 = vmatprep.mubr.f32.mxu0 0.0
    %262 = vmatmul.mubr.f32.gmra.mrb[0].mxu0 %v196
    %v263 = vpop.f32.mrb[0].mxu0
    %v264 = vadd.f32 0.0, %v263
    %v265 = vpop.f32.mrb[0].mxu0
    %266 = vdwg.mxu0
    %v268 = vrot.slane %v264, 4
    %v270 = vmax.f32 %v264, %v268
    %v271 = vsub.f32 %v264, %v270
    %v272 = vmul.f32 %v271, 1.442695
    %v273 = vpow.pop %v272
    %v274 = vadd.f32 %v273, 0.0
    %v276 = vrot.slane %v270, 4
    %v278 = vsub.f32 %v264, %v276
    %v279 = vmul.f32 %v278, 1.442695
    %v280 = vpow.pop %v279
    %v282 = vrot.slane %v280, 4
    %v284 = vadd.f32 %v274, %v282
    %v285 = vlog2.pop %v284
    %v286 = vmul.f32 %v285, 0.6931472
    %v287 = vsub.f32 %v271, %v286
    %v288 = vmul.f32 %v287, 1.442695
    %v289 = vpow.pop %v288
    %v291 = vlaneseq
    %v292 = vshrl.u32 %v291, 7
    %v293 = vsub.s32 0, %v292
    %v294 = vrot.slane %v81, %v293
    %v296 = vmul.f32 %v289, %v294
    %vm297 = vcmask 1043456
    %v298 = vsel %vm297, %v296, 0.0
    %299 = vadd.xlane.f32.xlu0 %v298
    %v300 = vpop.xlane.xlu0 %299
    %v301 = vlog2.pop %v300
    %v302 = vmul.f32 %v301, 0.6931472
    %v303 = vsub.f32 %v287, %v302
    %v304 = vmul.f32 %v289, %v303
    %v305 = vadd.f32 %v304, 0.0
    %v307 = vrot.slane %v286, 4
    %v309 = vsub.f32 %v278, %v307
    %v310 = vmul.f32 %v309, 1.442695
    %v311 = vpow.pop %v310
    %v312 = vmul.f32 %v311, %v294
    %vm313 = vcmask 1047556
    %v314 = vsel %vm313, %v312, 0.0
    %315 = vadd.xlane.f32.xlu0 %v314
    %v316 = vpop.xlane.xlu0 %315
    %v317 = vlog2.pop %v316
    %v318 = vmul.f32 %v317, 0.6931472
    %v319 = vsub.f32 %v309, %v318
    %v320 = vmul.f32 %v311, %v319
    %v322 = vrot.slane %v320, 4
    %v324 = vadd.f32 %v305, %v322
    %v325 = vmul.f32 %v294, %v324
    %v326 = vsel %vm297, %v325, 0.0
    %327 = vadd.xlane.f32.xlu0 %v326
    %v328 = vpop.xlane.xlu0 %327
    %v329 = vsub.f32 0.0, %v328
    %v330 = vlaneseq
    %v331 = vshrl.u32 %v330, 7
    %vm332 = vcmp.eq.s32.totalorder %v83, %v331
    %v333 = vsel %vm332, %v329, 0.0
    %v334 = vsel %vm297, %v333, 0.0
    %v335 = vrot.slane %v334, 4
    %v336 = vadd.f32 %v334, %v335
    %v337 = vrot.slane %v336, 2
    %v338 = vadd.f32 %v336, %v337
    %v339 = vrot.slane %v338, 1
    %v340 = vadd.f32 %v338, %v339
    %341 = vst [vmem:[%s6] sm:$0x1] %v340
    // Predicated region
    $region26: #{template_forward.1} parent=1 // pred_check
      _
    $region27: #{template_forward.1} parent=1 // pred_check_branch
      %343 = sbr.rel (0) target = $region29
    $region28: #{template_forward.1} parent=1 // pred_region
      _
    $region29: #{template_forward.1} parent=1 // pred_fallthru
      _
    // Predicated region
    $region30: #{template_forward.1} parent=1 // pred_check
      _
    $region31: #{template_forward.1} parent=1 // pred_check_branch
      %345 = sbr.rel (0) target = $region33
    $region32: #{template_forward.1} parent=1 // pred_region
      _
    $region33: #{template_forward.1} parent=1 // pred_fallthru
      _
    // Predicated region
    $region34: #{template_forward.1} parent=1 // pred_check
      _
    $region35: #{template_forward.1} parent=1 // pred_check_branch
      %347 = sbr.rel (0) target = $region37
    $region36: #{template_forward.1} parent=1 // pred_region
      _
    $region37: #{template_forward.1} parent=1 // pred_fallthru
      _
    // Predicated region
    $region38: #{template_forward.1} parent=1 // pred_check
      _
    $region39: #{template_forward.1} parent=1 // pred_check_branch
      %349 = sbr.rel (0) target = $region41
    $region40: #{template_forward.1} parent=1 // pred_region
      _
    $region41: #{template_forward.1} parent=1 // pred_fallthru
      _
    // Predicated region
    $region42: #{template_forward.1} parent=1 // pred_check
      _
    $region43: #{template_forward.1} parent=1 // pred_check_branch
      %351 = sbr.rel (0) target = $region45
    $region44: #{template_forward.1} parent=1 // pred_region
      _
    $region45: #{template_forward.1} parent=1 // pred_fallthru
      _
    // Predicated region
    $region46: #{template_forward.1} parent=1 // pred_check
      _
    $region47: #{template_forward.1} parent=1 // pred_check_branch
      %353 = sbr.rel (0) target = $region49
    $region48: #{template_forward.1} parent=1 // pred_region
      _
    $region49: #{template_forward.1} parent=1 // pred_fallthru
      _
    %354 = vsyncpa [#allocation3], 1
    %355 = vsyncpa [#allocation5], 1

</llo_original>
